<compile_context>
chip_gen: v7x
topology: tpu7x:2x2x1
jax: 0.10.0
libtpu: 0.0.40
codegen_flags: <defaults>
</compile_context>

<pallas_src>
import functools

import jax
import jax.numpy as jnp
from jax.experimental import pallas as pl
from jax.experimental.pallas import tpu as pltpu

EPS = 1e-16

# Pipeline-buffer budget: 2 input double-buffers + 2 output double-buffers
# + in-kernel f32 temporaries must fit comfortably in scoped VMEM on every
# generation (v7x physical VMEM is only 64 MiB/TC -> stay modest).
_VMEM_BUFFER_BUDGET = 16 * 1024 * 1024   # bytes for pipeline buffers + f32 temps
_VMEM_LIMIT_BYTES = 32 * 1024 * 1024     # raised scoped-VMEM limit (safe v5e..v7x)
_MAX_BLOCK_ROWS = 2048                   # ~2-4 MiB tiles already hit the HBM roofline


def _round_up(n: int, m: int) -> int:
    return ((n + m - 1) // m) * m


def _sublane_pack(itemsize: int) -> int:
    # f32 -> 8, bf16 -> 16, int8/fp8 -> 32 (sub-32-bit dtypes pack along sublanes).
    return 8 * max(1, 4 // itemsize)


def _is_multicore_device() -> bool:
    """True on chips with >1 TensorCore per device (v4/v5p megacore, v7x)."""
    try:
        kind = jax.devices()[0].device_kind.lower()
    except Exception:
        return True  # splitting costs only ~0.35 us/step; default to splitting
    return any(tag in kind for tag in ("v4", "v5p", "v7"))


def _choose_block_rows(batch: int, d: int, itemsize: int, granule: int,
                       multi_core: bool) -> int:
    """Largest batch-axis block (multiple of `granule`) fitting the VMEM budget.

    Accounts for: 2x input tile + 2x output tile (native dtype, double-buffered)
    plus ~2 full-tile f32 temporaries created by the in-kernel upcast.
    """
    bytes_per_row = max(1, d * (4 * itemsize + 8))
    blk = _VMEM_BUFFER_BUDGET // bytes_per_row
    blk = min(blk, _MAX_BLOCK_ROWS, _round_up(batch, granule))
    blk = max(granule, (blk // granule) * granule)
    if multi_core and blk >= batch and batch >= 2 * granule:
        # Force >=2 grid steps so ("parallel",) shards the batch across the
        # 2 TensorCores; single-TC chips keep one maximal block instead.
        half = _round_up(-(-batch // 2), granule)
        blk = max(granule, min(blk, half))
    return blk
    # Note: for extremely large D (where even `granule` rows blow the budget) a
    # split-D two-pass kernel with a sum-of-squares accumulator would be needed;
    # not required for this module's hidden sizes.


def _l2norm_kernel(x_ref, o_ref, *, eps):
    # x_ref: (block_rows, D); normalize along the last (lane) axis.
    x = x_ref[...].astype(jnp.float32)
    sq = jnp.sum(x * x, axis=-1, keepdims=True)          # XLU lane reduction
    # x / max(||x||, eps) == x * rsqrt(max(||x||^2, eps^2))  (sqrt is monotone);
    # rsqrt lowers to the otherwise-idle EUP slot instead of a VALU divide.
    inv = jax.lax.rsqrt(jnp.maximum(sq, eps * eps))
    o_ref[...] = (x * inv).astype(o_ref.dtype)


def l2_normalize(x: jax.Array, *, eps: float = EPS) -> jax.Array:
    """L2-normalize a (batch, features) array along dim=1 (== F.normalize(p=2, dim=1))."""
    if x.ndim != 2:
        raise ValueError(f"expected 2D (batch, features), got shape {x.shape}")
    b, d = x.shape
    itemsize = jnp.dtype(x.dtype).itemsize
    blk = _choose_block_rows(b, d, itemsize, _sublane_pack(itemsize),
                             _is_multicore_device())
    grid = (pl.cdiv(b, blk),)
    return pl.pallas_call(
        functools.partial(_l2norm_kernel, eps=eps),
        out_shape=jax.ShapeDtypeStruct((b, d), x.dtype),
        grid=grid,
        in_specs=[pl.BlockSpec((blk, d), lambda i: (i, 0))],
        out_specs=pl.BlockSpec((blk, d), lambda i: (i, 0)),
        compiler_params=pltpu.CompilerParams(
            dimension_semantics=("parallel",),
            vmem_limit_bytes=_VMEM_LIMIT_BYTES,
        ),
        cost_estimate=pl.CostEstimate(
            flops=3 * b * d,
            transcendentals=b,
            bytes_accessed=2 * b * d * itemsize,
        ),
    )(x)


if __name__ == "__main__":
    key = jax.random.PRNGKey(0)
    k1, k2, k3, k4 = jax.random.split(key, 4)

    # Small shapes consistent with the MLP usage (batch, hidden).
    # Exercises narrow-D (masked lane stores), D >= 128, ragged batch (tail
    # masking), and a sub-32-bit dtype (sublane packing + f32 upcast path).
    cases = {
        "narrow_D": jax.random.normal(k1, (8, 32), dtype=jnp.float32),
        "wide_D": jax.random.normal(k2, (16, 256), dtype=jnp.float32),
        "ragged_batch": jax.random.normal(k3, (10, 128), dtype=jnp.float32),
        "bf16": jax.random.normal(k4, (16, 64), dtype=jnp.bfloat16),
    }

    for name, x in cases.items():
        out = l2_normalize(x)
        jax.block_until_ready(out)
        # reference check (plain JAX, same semantics as F.normalize)
        xf = x.astype(jnp.float32)
        ref = (xf / jnp.maximum(
            jnp.sqrt(jnp.sum(xf * xf, axis=1, keepdims=True)), EPS)).astype(x.dtype)
        assert out.shape == x.shape and out.dtype == x.dtype, name
        tol = 1e-2 if x.dtype == jnp.bfloat16 else 1e-5
        assert jnp.allclose(out.astype(jnp.float32), ref.astype(jnp.float32),
                            atol=tol, rtol=tol), f"mismatch vs reference: {name}"

    print("KERNEL_OK")
</pallas_src>

<mosaic_0001>
module attributes {stable_mosaic.version = 11 : i64} {
  func.func @_l2norm_kernel(%arg0: i32, %arg1: memref<8x32xf32, #tpu.memory_space<vmem>>, %arg2: memref<8x32xf32, #tpu.memory_space<vmem>>) attributes {dimension_semantics = [#tpu.dimension_semantics<parallel>], iteration_bounds = array<i64: 1>, scalar_prefetch = 0 : i64, scratch_operands = 0 : i64, tpu.core_type = #tpu.core_type<tc>, window_params = [{transform_indices = @transform_0, window_bounds = array<i64: 8, 32>}, {transform_indices = @transform_1, window_bounds = array<i64: 8, 32>}]} {
    %c0 = arith.constant 0 : index
    %c0_0 = arith.constant 0 : index
    %0 = vector.load %arg1[%c0, %c0_0] : memref<8x32xf32, #tpu.memory_space<vmem>>, vector<8x32xf32>
    %1 = arith.mulf %0, %0 : vector<8x32xf32>
    %cst = arith.constant dense<0.000000e+00> : vector<8xf32>
    %2 = vector.multi_reduction <add>, %1, %cst [1] : vector<8x32xf32> to vector<8xf32>
    %3 = vector.shape_cast %2 : vector<8xf32> to vector<8x1xf32>
    %cst_1 = arith.constant 1.000000e-32 : f32
    %4 = vector.broadcast %cst_1 : f32 to vector<8x1xf32>
    %5 = arith.maximumf %3, %4 : vector<8x1xf32>
    %6 = math.rsqrt %5 : vector<8x1xf32>
    %7 = vector.broadcast %6 : vector<8x1xf32> to vector<8x32xf32>
    %8 = arith.mulf %0, %7 : vector<8x32xf32>
    %c0_2 = arith.constant 0 : index
    %c0_3 = arith.constant 0 : index
    %9 = vector.load %arg2[%c0_2, %c0_3] : memref<8x32xf32, #tpu.memory_space<vmem>>, vector<8x32xf32>
    tpu.vector_store %arg2[%c0_2, %c0_3], %8 {strides = array<i32>} : memref<8x32xf32, #tpu.memory_space<vmem>>, vector<8x32xf32>,
    return
  }
  func.func @transform_0(%arg0: i32) -> (i32, i32) {
    %c0_i32 = arith.constant 0 : i32
    %c0_i32_0 = arith.constant 0 : i32
    return %arg0, %c0_i32 : i32, i32
  }
  func.func @transform_1(%arg0: i32) -> (i32, i32) {
    %c0_i32 = arith.constant 0 : i32
    %c0_i32_0 = arith.constant 0 : i32
    return %arg0, %c0_i32 : i32, i32
  }
}

</mosaic_0001>

<llo_original>
// kernel: tpu_custom_call.1
$region0: #{tpu_custom_call.1}
  #allocation0 [shape = 'u32[]', space=smem, size = 0x4, offset = 0x4, fixed_abs, tag = 'smem constant byte address 0x4 - core index']
  #allocation1 [shape = 'u32[144,128]{1,0:T(1,128)}', space=vmem, size = 0x12000, scoped, tag = 'internal scratch']
  %s0 = inlined_call_operand.hbm [shape: f32[8,32], index: 0, kind: input, shape index: {}]
  %s1 = inlined_call_operand.hbm [shape: f32[8,32], index: 1, kind: output, shape index: {}]
  %s2 = sld [smem:[#allocation0]]
  $region18: #{tpu_custom_call.1} parent=0
    _
  %s4 = ssub.s32 1, %s2
  %s5 = scalar_select 0, %s4, %s2
  $region1: #{tpu_custom_call.1} parent=0
    #allocation2 [shape = 'u8[4096]{0}', space=vmem, size = 0x1000, scoped, tag = 'input window, operand 0, single buffered']
    #allocation3 [shape = 's32[1]{0}', space=sflag, size = 0x4, scoped, tag = 'scoped memory for tpu_custom_call.1']
    #allocation4 [shape = 's32[1]{0}', space=sflag, size = 0x4, scoped, tag = 'scoped memory for tpu_custom_call.1']
    #allocation5 [shape = 'u8[4096]{0}', space=vmem, size = 0x1000, scoped, tag = 'output window, operand 0, single buffered']
    %6 = vsyncpa [#allocation3], 0
    %7 = vsyncpa [#allocation4], 0
    // Predicated region
    $region2: #{tpu_custom_call.1} parent=1 // pred_check
      _
    $region3: #{tpu_custom_call.1} parent=1 // pred_check_branch
      %9 = sbr.rel (0) target = $region5
    $region4: #{tpu_custom_call.1} parent=1 // pred_region
      %s11 = ssub.s32 128, 128
      %12 = vsyncadd [#allocation3], %s11
      %s14 = sshll.u32 [#allocation2], 4
      %s15 = int_to_ptr.vmem [resolvable:$true] %s14
      %17 = dma.hbm_to_vmem [thread:$0]  %s0, 128, %s15, [#allocation3]
    $region5: #{tpu_custom_call.1} parent=1 // pred_fallthru
      _
    // Predicated region
    $region6: #{tpu_custom_call.1} parent=1 // pred_check
      _
    $region7: #{tpu_custom_call.1} parent=1 // pred_check_branch
      %19 = sbr.rel (0) target = $region9
    $region8: #{tpu_custom_call.1} parent=1 // pred_region
      %20 = dma.done [#allocation3], 128
    $region9: #{tpu_custom_call.1} parent=1 // pred_fallthru
      _
    %v21 = vld [vmem:[#allocation2] sm:$0xff]
    %v22 = vmul.f32 %v21, %v21
    %vm23 = vcmask 261120
    %v24 = vsel %vm23, %v22, 0.0
    %25 = vadd.xlane.f32.xlu0 %v24
    %v26 = vpop.xlane.xlu0 %25
    %v27 = vmax.f32 %v26, 1e-32
    %v28 = vrsqrt.pop %v27
    %v29 = vmul.f32 %v21, %v28
    %30 = vst.msk [vmem:[#allocation5] sm:$0xff] %vm23, %v29
    // Predicated region
    $region10: #{tpu_custom_call.1} parent=1 // pred_check
      _
    $region11: #{tpu_custom_call.1} parent=1 // pred_check_branch
      %32 = sbr.rel (0) target = $region13
    $region12: #{tpu_custom_call.1} parent=1 // pred_region
      %s34 = ssub.s32 128, 128
      %35 = vsyncadd [#allocation4], %s34
      %s37 = sshll.u32 [#allocation5], 4
      %s38 = int_to_ptr.vmem [resolvable:$true] %s37
      %40 = dma.vmem_to_hbm [thread:$0]  %s38, 128, %s1, [#allocation4]
    $region13: #{tpu_custom_call.1} parent=1 // pred_fallthru
      _
    // Predicated region
    $region14: #{tpu_custom_call.1} parent=1 // pred_check
      _
    $region15: #{tpu_custom_call.1} parent=1 // pred_check_branch
      %42 = sbr.rel (0) target = $region17
    $region16: #{tpu_custom_call.1} parent=1 // pred_region
      %43 = dma.done [#allocation4], 128
    $region17: #{tpu_custom_call.1} parent=1 // pred_fallthru
      _
    %44 = vsyncpa [#allocation3], 1
    %45 = vsyncpa [#allocation4], 1

</llo_original>
